<compile_context>
chip_gen: v5e
topology: v5e:2x2
jax: 0.10.0
libtpu: 0.0.40
codegen_flags: <defaults>
</compile_context>

<pallas_src>
import math
import jax
import jax.numpy as jnp
from jax.experimental import pallas as pl
from jax.experimental.pallas import tpu as pltpu


def _round_up(x: int, m: int) -> int:
    return ((x + m - 1) // m) * m


def _cclinear_kernel(x_ref, w_ref, xcm_ref, b_ref, o_ref, acc_ref):
    # x_ref  : (tm, tk)  input tile
    # w_ref  : (tn, tk)  RAW v_weight tile (not centered)
    # xcm_ref: (tm, 1)   f32 hoisted rank-1 correction  (x . col_mean) per row
    # b_ref  : (1,  tn)  centered bias tile, f32
    # o_ref  : (tm, tn)  output tile
    # acc_ref: (tm, tn)  f32 accumulator scratch
    k = pl.program_id(2)

    @pl.when(k == 0)
    def _():
        acc_ref[...] = jnp.zeros_like(acc_ref)

    # x @ w.T without an explicit transpose: contract the K axis of both
    # operands (natively supported transposed-RHS MXU path).
    acc_ref[...] += jax.lax.dot_general(
        x_ref[...], w_ref[...],
        dimension_numbers=(((1,), (1,)), ((), ())),
        preferred_element_type=jnp.float32)

    @pl.when(k == pl.num_programs(2) - 1)
    def _():
        # out = x @ (W - 1*col_mean)^T + centered_bias
        #     = acc - xcm (broadcast over N) + b (broadcast over M)
        o_ref[...] = (acc_ref[...] - xcm_ref[...] + b_ref[...]).astype(o_ref.dtype)


def cclinear_flag(x, v_weight, v_bias, *, tm=512, tn=512, tk=512):
    """Forward pass of CClinear_flag.  x: [..., in_features]."""
    *lead, K = x.shape
    N, K2 = v_weight.shape
    assert K2 == K, "v_weight in_features mismatch"
    M = math.prod(lead) if lead else 1
    x2 = x.reshape(M, K)

    # --- Hoisted (one-shot, cheap) centering statistics, computed in f32. ---
    vw_f32 = v_weight.astype(jnp.float32)
    col_mean = jnp.mean(vw_f32, axis=0)                                  # (K,)
    vb_f32 = v_bias.astype(jnp.float32)
    b = (vb_f32 - jnp.mean(vb_f32)).reshape(1, N)                        # (1, N) f32
    # Rank-1 correction vector: one GEMV over x, hoisted out of the hot loop.
    xcm = jnp.dot(x2.astype(jnp.float32), col_mean.reshape(K, 1))        # (M, 1) f32

    # --- Tile sizes: respect (8, 128) granularity, don't exceed problem. ---
    tm = min(tm, _round_up(M, 8))
    tn = min(tn, _round_up(N, 128))
    tk = min(tk, _round_up(K, 128))

    # Only the reduction (K) axis needs explicit zero padding; ragged M / N
    # are handled by Pallas edge blocks (OOB outputs are masked on store).
    Kp = _round_up(K, tk)
    x_p = jnp.pad(x2, ((0, 0), (0, Kp - K))) if Kp != K else x2
    w_p = jnp.pad(v_weight, ((0, 0), (0, Kp - K))) if Kp != K else v_weight

    grid = (pl.cdiv(M, tm), pl.cdiv(N, tn), Kp // tk)

    x_bytes = jnp.dtype(x.dtype).itemsize
    w_bytes = jnp.dtype(v_weight.dtype).itemsize
    cost = pl.CostEstimate(
        flops=2 * M * N * Kp,
        transcendentals=0,
        bytes_accessed=int(M * Kp * x_bytes * grid[1]      # x re-read per N tile
                           + N * Kp * w_bytes * grid[0]    # W re-read per M tile
                           + M * N * x_bytes               # output
                           + M * 4 + N * 4))               # xcm + bias

    out = pl.pallas_call(
        _cclinear_kernel,
        out_shape=jax.ShapeDtypeStruct((M, N), x.dtype),
        grid_spec=pltpu.PrefetchScalarGridSpec(
            num_scalar_prefetch=0,
            grid=grid,
            in_specs=[
                pl.BlockSpec((tm, tk), lambda i, j, k: (i, k)),   # x tile
                pl.BlockSpec((tn, tk), lambda i, j, k: (j, k)),   # raw weight tile
                pl.BlockSpec((tm, 1), lambda i, j, k: (i, 0)),    # hoisted correction
                pl.BlockSpec((1, tn), lambda i, j, k: (0, j)),    # centered bias
            ],
            out_specs=pl.BlockSpec((tm, tn), lambda i, j, k: (i, j)),
            scratch_shapes=[
                pltpu.VMEM((tm, tn), jnp.float32),   # matmul accumulator
            ],
        ),
        compiler_params=pltpu.CompilerParams(
            dimension_semantics=("parallel", "parallel", "arbitrary")),
        cost_estimate=cost,
    )(x_p, w_p, xcm, b)

    return out.reshape(*lead, N)


if __name__ == "__main__":
    # Small shapes consistent with a linear layer on a (batch, seq, hidden) input.
    batch, seq = 2, 8
    in_features, out_features = 32, 64

    key = jax.random.PRNGKey(0)
    kx, kw, kb = jax.random.split(key, 3)

    # Deterministic parameter init mirroring reset_parameters():
    #   kaiming_uniform_(a=sqrt(5)) / uniform bias -> U(-1/sqrt(fan_in), +)
    bound = 1.0 / math.sqrt(in_features)
    v_weight = jax.random.uniform(
        kw, (out_features, in_features), jnp.float32, minval=-bound, maxval=bound)
    v_bias = jax.random.uniform(
        kb, (out_features,), jnp.float32, minval=-bound, maxval=bound)

    x = jax.random.normal(kx, (batch, seq, in_features), jnp.float32)

    fwd = jax.jit(cclinear_flag)
    out = fwd(x, v_weight, v_bias)
    out = jax.block_until_ready(out)

    # Reference check in plain JAX (same math as the PyTorch forward).
    w_ref = v_weight - jnp.mean(v_weight, axis=0, keepdims=True)
    b_ref = v_bias - jnp.mean(v_bias)
    ref = x @ w_ref.T + b_ref
    assert out.shape == (batch, seq, out_features)
    assert jnp.allclose(out, ref, atol=1e-4, rtol=1e-4), \
        float(jnp.max(jnp.abs(out - ref)))

    print("KERNEL_OK")
</pallas_src>

<mosaic_0001>
module attributes {stable_mosaic.version = 11 : i64} {
  func.func @_cclinear_kernel(%arg0: i32, %arg1: i32, %arg2: i32, %arg3: memref<16x128xf32, #tpu.memory_space<vmem>>, %arg4: memref<128x128xf32, #tpu.memory_space<vmem>>, %arg5: memref<16x1xf32, #tpu.memory_space<vmem>>, %arg6: memref<1x128xf32, #tpu.memory_space<vmem>>, %arg7: memref<16x128xf32, #tpu.memory_space<vmem>>, %arg8: memref<16x128xf32, #tpu.memory_space<vmem>>) attributes {dimension_semantics = [#tpu.dimension_semantics<parallel>, #tpu.dimension_semantics<parallel>, #tpu.dimension_semantics<arbitrary>], iteration_bounds = array<i64: 1, 1, 1>, scalar_prefetch = 0 : i64, scratch_operands = 1 : i64, tpu.core_type = #tpu.core_type<tc>, window_params = [{transform_indices = @transform_0, window_bounds = array<i64: 16, 128>}, {transform_indices = @transform_1, window_bounds = array<i64: 128, 128>}, {transform_indices = @transform_2, window_bounds = array<i64: 16, 1>}, {transform_indices = @transform_3, window_bounds = array<i64: 1, 128>}, {transform_indices = @transform_4, window_bounds = array<i64: 16, 128>}]} {
    %c0_i32 = arith.constant 0 : i32
    %0 = arith.cmpi eq, %arg2, %c0_i32 : i32
    %1 = arith.extui %0 : i1 to i32
    %c0_i32_0 = arith.constant 0 : i32
    %2 = arith.cmpi ne, %1, %c0_i32_0 : i32
    scf.if %2 {
      %cst_10 = arith.constant 0.000000e+00 : f32
      %12 = vector.broadcast %cst_10 : f32 to vector<16x128xf32>
      %c0_11 = arith.constant 0 : index
      %c0_12 = arith.constant 0 : index
      %13 = vector.load %arg8[%c0_11, %c0_12] : memref<16x128xf32, #tpu.memory_space<vmem>>, vector<16x128xf32>
      tpu.vector_store %arg8[%c0_11, %c0_12], %12 {strides = array<i32>} : memref<16x128xf32, #tpu.memory_space<vmem>>, vector<16x128xf32>,
    } else {
    }
    %c0 = arith.constant 0 : index
    %c0_1 = arith.constant 0 : index
    %3 = vector.load %arg8[%c0, %c0_1] : memref<16x128xf32, #tpu.memory_space<vmem>>, vector<16x128xf32>
    %c0_2 = arith.constant 0 : index
    %c0_3 = arith.constant 0 : index
    %4 = vector.load %arg3[%c0_2, %c0_3] : memref<16x128xf32, #tpu.memory_space<vmem>>, vector<16x128xf32>
    %c0_4 = arith.constant 0 : index
    %c0_5 = arith.constant 0 : index
    %5 = vector.load %arg4[%c0_4, %c0_5] : memref<128x128xf32, #tpu.memory_space<vmem>>, vector<128x128xf32>
    %cst = arith.constant dense<0.000000e+00> : vector<16x128xf32>
    %6 = tpu.matmul %4, %5, %cst {dimension_numbers = #tpu.dot_dimension_numbers<[1], [1], [0], [0], [0, 0, 1, 0], [], []>} : vector<16x128xf32>, vector<128x128xf32>, vector<16x128xf32> -> vector<16x128xf32>
    %7 = arith.addf %3, %6 : vector<16x128xf32>
    %c0_6 = arith.constant 0 : index
    %c0_7 = arith.constant 0 : index
    %8 = vector.load %arg8[%c0_6, %c0_7] : memref<16x128xf32, #tpu.memory_space<vmem>>, vector<16x128xf32>
    tpu.vector_store %arg8[%c0_6, %c0_7], %7 {strides = array<i32>} : memref<16x128xf32, #tpu.memory_space<vmem>>, vector<16x128xf32>,
    %c0_i32_8 = arith.constant 0 : i32
    %9 = arith.cmpi eq, %arg2, %c0_i32_8 : i32
    %10 = arith.extui %9 : i1 to i32
    %c0_i32_9 = arith.constant 0 : i32
    %11 = arith.cmpi ne, %10, %c0_i32_9 : i32
    scf.if %11 {
      %c0_10 = arith.constant 0 : index
      %c0_11 = arith.constant 0 : index
      %12 = vector.load %arg8[%c0_10, %c0_11] : memref<16x128xf32, #tpu.memory_space<vmem>>, vector<16x128xf32>
      %c0_12 = arith.constant 0 : index
      %c0_13 = arith.constant 0 : index
      %13 = vector.load %arg5[%c0_12, %c0_13] : memref<16x1xf32, #tpu.memory_space<vmem>>, vector<16x1xf32>
      %14 = vector.broadcast %13 : vector<16x1xf32> to vector<16x128xf32>
      %15 = arith.subf %12, %14 : vector<16x128xf32>
      %c0_14 = arith.constant 0 : index
      %c0_15 = arith.constant 0 : index
      %16 = vector.load %arg6[%c0_14, %c0_15] : memref<1x128xf32, #tpu.memory_space<vmem>>, vector<1x128xf32>
      %17 = vector.broadcast %16 : vector<1x128xf32> to vector<16x128xf32>
      %18 = arith.addf %15, %17 : vector<16x128xf32>
      %c0_16 = arith.constant 0 : index
      %c0_17 = arith.constant 0 : index
      %19 = vector.load %arg7[%c0_16, %c0_17] : memref<16x128xf32, #tpu.memory_space<vmem>>, vector<16x128xf32>
      tpu.vector_store %arg7[%c0_16, %c0_17], %18 {strides = array<i32>} : memref<16x128xf32, #tpu.memory_space<vmem>>, vector<16x128xf32>,
    } else {
    }
    return
  }
  func.func @transform_0(%arg0: i32, %arg1: i32, %arg2: i32) -> (i32, i32) {
    %c0_i32 = arith.constant 0 : i32
    return %arg0, %arg2 : i32, i32
  }
  func.func @transform_1(%arg0: i32, %arg1: i32, %arg2: i32) -> (i32, i32) {
    %c0_i32 = arith.constant 0 : i32
    return %arg1, %arg2 : i32, i32
  }
  func.func @transform_2(%arg0: i32, %arg1: i32, %arg2: i32) -> (i32, i32) {
    %c0_i32 = arith.constant 0 : i32
    %c0_i32_0 = arith.constant 0 : i32
    return %arg0, %c0_i32 : i32, i32
  }
  func.func @transform_3(%arg0: i32, %arg1: i32, %arg2: i32) -> (i32, i32) {
    %c0_i32 = arith.constant 0 : i32
    %c0_i32_0 = arith.constant 0 : i32
    return %c0_i32, %arg1 : i32, i32
  }
  func.func @transform_4(%arg0: i32, %arg1: i32, %arg2: i32) -> (i32, i32) {
    %c0_i32 = arith.constant 0 : i32
    return %arg0, %arg1 : i32, i32
  }
}

</mosaic_0001>

<llo_original>
// kernel: cclinear_flag.1
$region0: #{cclinear_flag.1}
  #allocation0 [shape = 'u32[]', space=smem, size = 0x4, offset = 0x4, fixed_abs, tag = 'smem constant byte address 0x4 - core index']
  #allocation1 [shape = 'u32[72,128]{1,0:T(1,128)}', space=vmem, size = 0x9000, scoped, tag = 'internal scratch']
  #allocation2 [shape = 'f32[16,128]{1,0:T(8,128)}', space=vmem, size = 0x2000, scoped, tag = 'scratch operand']
  %s0 = inlined_call_operand.vmem [shape: f32[16,128], index: 0, kind: input, shape index: {}]
  %s1 = inlined_call_operand.vmem [shape: f32[64,128], index: 1, kind: input, shape index: {}]
  %s2 = inlined_call_operand.vmem [shape: f32[16,1], index: 2, kind: input, shape index: {}]
  %s3 = inlined_call_operand.vmem [shape: f32[1,64], index: 3, kind: input, shape index: {}]
  %s4 = inlined_call_operand.hbm [shape: f32[16,64], index: 4, kind: output, shape index: {}]
  %s5 = sld [smem:[#allocation0]]
  $region34: #{cclinear_flag.1} parent=0
    _
  %s7 = ssub.s32 1, %s5
  %s8 = scalar_select 0, %s7, %s5
  $region1: #{cclinear_flag.1} parent=0
    #allocation3 [shape = 'u8[8192]{0}', space=vmem, size = 0x2000, scoped, tag = 'output window, operand 0, single buffered']
    #allocation4 [shape = 's32[1]{0}', space=sflag, size = 0x4, scoped, tag = 'scoped memory for cclinear_flag.1']
    %9 = vsyncpa [#allocation4], 0
    // Predicated region
    $region2: #{cclinear_flag.1} parent=1 // pred_check
      _
    $region3: #{cclinear_flag.1} parent=1 // pred_check_branch
      %11 = sbr.rel (0) target = $region5
    $region4: #{cclinear_flag.1} parent=1 // pred_region
      _
    $region5: #{cclinear_flag.1} parent=1 // pred_fallthru
      _
    // Predicated region
    $region6: #{cclinear_flag.1} parent=1 // pred_check
      _
    $region7: #{cclinear_flag.1} parent=1 // pred_check_branch
      %13 = sbr.rel (0) target = $region9
    $region8: #{cclinear_flag.1} parent=1 // pred_region
      _
    $region9: #{cclinear_flag.1} parent=1 // pred_fallthru
      _
    // Predicated region
    $region10: #{cclinear_flag.1} parent=1 // pred_check
      _
    $region11: #{cclinear_flag.1} parent=1 // pred_check_branch
      %15 = sbr.rel (0) target = $region13
    $region12: #{cclinear_flag.1} parent=1 // pred_region
      _
    $region13: #{cclinear_flag.1} parent=1 // pred_fallthru
      _
    // Predicated region
    $region14: #{cclinear_flag.1} parent=1 // pred_check
      _
    $region15: #{cclinear_flag.1} parent=1 // pred_check_branch
      %17 = sbr.rel (0) target = $region17
    $region16: #{cclinear_flag.1} parent=1 // pred_region
      _
    $region17: #{cclinear_flag.1} parent=1 // pred_fallthru
      _
    %p18 = scmp.eq.s32.totalorder 0, 0
    // Predicated region
    $region18: #{cclinear_flag.1} parent=1 // pred_check
      %p19 = pneg %p18
    $region19: #{cclinear_flag.1} parent=1 // pred_check_branch
      %21 = sbr.rel (%p19) target = $region21
    $region20: #{cclinear_flag.1} parent=1 // pred_region
      %22 = vst [vmem:[#allocation2] sm:$0xff] 0.0
      %23 = vst [vmem:[#allocation2 + $0x8] sm:$0xff] 0.0
    $region21: #{cclinear_flag.1} parent=1 // pred_fallthru
      _
    %v24 = vld [vmem:[#allocation2] sm:$0xff]
    %v25 = vld [vmem:[#allocation2 + $0x8] sm:$0xff]
    %v26 = vld [vmem:[%s0] sm:$0xff]
    %v27 = vld [vmem:[%s0 + $0x8] sm:$0xff]
    %v28 = vld [vmem:[%s1] sm:$0xff]
    %v29 = vld [vmem:[%s1 + $0x8] sm:$0xff]
    %v30 = vld [vmem:[%s1 + $0x10] sm:$0xff]
    %v31 = vld [vmem:[%s1 + $0x18] sm:$0xff]
    %v32 = vld [vmem:[%s1 + $0x20] sm:$0xff]
    %v33 = vld [vmem:[%s1 + $0x28] sm:$0xff]
    %v34 = vld [vmem:[%s1 + $0x30] sm:$0xff]
    %v35 = vld [vmem:[%s1 + $0x38] sm:$0xff]
    %v36 = vld [vmem:[%s1 + $0x40] sm:$0xff]
    %v37 = vld [vmem:[%s1 + $0x48] sm:$0xff]
    %v38 = vld [vmem:[%s1 + $0x50] sm:$0xff]
    %v39 = vld [vmem:[%s1 + $0x58] sm:$0xff]
    %v40 = vld [vmem:[%s1 + $0x60] sm:$0xff]
    %v41 = vld [vmem:[%s1 + $0x68] sm:$0xff]
    %v42 = vld [vmem:[%s1 + $0x70] sm:$0xff]
    %v43 = vld [vmem:[%s1 + $0x78] sm:$0xff]
    %44 = vmatpush.xpose.msra.mxu0 %v43
    %45 = vmatpush.xpose.msra.mxu0 %v42
    %46 = vmatpush.xpose.msra.mxu0 %v41
    %47 = vmatpush.xpose.msra.mxu0 %v40
    %48 = vmatpush.xpose.msra.mxu0 %v39
    %49 = vmatpush.xpose.msra.mxu0 %v38
    %50 = vmatpush.xpose.msra.mxu0 %v37
    %51 = vmatpush.xpose.msra.mxu0 %v36
    %52 = vmatpush.xpose.msra.mxu0 %v35
    %53 = vmatpush.xpose.msra.mxu0 %v34
    %54 = vmatpush.xpose.msra.mxu0 %v33
    %55 = vmatpush.xpose.msra.mxu0 %v32
    %56 = vmatpush.xpose.msra.mxu0 %v31
    %57 = vmatpush.xpose.msra.mxu0 %v30
    %58 = vmatpush.xpose.msra.mxu0 %v29
    %59 = vmatpush.xpose.msra.mxu0 %v28
    %60 = vmatmul.f32.gmra.mxu0 %v26
    %v61 = vpop.f32.mrf.mxu0
    %v62 = vadd.f32 0.0, %v61
    %63 = vmatmul.f32.gmra.mxu0 %v27
    %v64 = vpop.f32.mrf.mxu0
    %v65 = vadd.f32 0.0, %v64
    %66 = vdwg.mxu0
    %v67 = vadd.f32 %v24, %v62
    %v68 = vadd.f32 %v25, %v65
    %69 = vst [vmem:[#allocation2] sm:$0xff] %v67
    %70 = vst [vmem:[#allocation2 + $0x8] sm:$0xff] %v68
    // Predicated region
    $region22: #{cclinear_flag.1} parent=1 // pred_check
      %p71 = pneg %p18
    $region23: #{cclinear_flag.1} parent=1 // pred_check_branch
      %73 = sbr.rel (%p71) target = $region25
    $region24: #{cclinear_flag.1} parent=1 // pred_region
      %v74 = vld [vmem:[#allocation2] sm:$0xff]
      %v75 = vld [vmem:[#allocation2 + $0x8] sm:$0xff]
      %v76 = vld [vmem:[%s2] sm:$0xff]
      %v77 = vld [vmem:[%s2 + $0x8] sm:$0xff]
      %79 = vset.pattern.permute.xlu0 0
      %80 = vperm.xlu0 %79, %v76
      %v81 = vpop.permute.xlu0 %80
      %84 = vset.pattern.permute.xlu0 0
      %85 = vperm.xlu0 %84, %v77
      %v86 = vpop.permute.xlu0 %85
      %v88 = vsub.f32 %v74, %v81
      %v89 = vsub.f32 %v75, %v86
      %v90 = vld [vmem:[%s3] sm:$0x1]
      %v92 = vperm.slane %v90, 0
      %v94 = vadd.f32 %v88, %v92
      %v95 = vadd.f32 %v89, %v92
      %96 = vst [vmem:[#allocation3] sm:$0xff] %v94
      %97 = vst [vmem:[#allocation3 + $0x8] sm:$0xff] %v95
    $region25: #{cclinear_flag.1} parent=1 // pred_fallthru
      _
    // Predicated region
    $region26: #{cclinear_flag.1} parent=1 // pred_check
      _
    $region27: #{cclinear_flag.1} parent=1 // pred_check_branch
      %99 = sbr.rel (0) target = $region29
    $region28: #{cclinear_flag.1} parent=1 // pred_region
      %101 = vsyncadd [#allocation4], 0
      %s102 = sshll.u32 [#allocation3], 4
      %s103 = int_to_ptr.vmem [resolvable:$true] %s102
      %s104 = sshll.u32 %s4, 4
      %s105 = int_to_ptr.hbm [resolvable:$true] %s104
      %110 = dma.vmem_to_hbm [thread:$0]  %s103, 256, %s105, [#allocation4], 128, 128, 8
    $region29: #{cclinear_flag.1} parent=1 // pred_fallthru
      _
    // Predicated region
    $region30: #{cclinear_flag.1} parent=1 // pred_check
      _
    $region31: #{cclinear_flag.1} parent=1 // pred_check_branch
      %112 = sbr.rel (0) target = $region33
    $region32: #{cclinear_flag.1} parent=1 // pred_region
      %114 = dma.done [#allocation4], 256
    $region33: #{cclinear_flag.1} parent=1 // pred_fallthru
      _
    %115 = vsyncpa [#allocation4], 1

</llo_original>
